<compile_context>
chip_gen: v6e
topology: v6e:2x2x1
jax: 0.10.0
libtpu: 0.0.40
codegen_flags: <defaults>
</compile_context>

<pallas_src>
import jax
import jax.numpy as jnp
from jax.experimental import pallas as pl
from jax.experimental.pallas import tpu as pltpu

K = 7          # fused kernel size (largest branch)
PAD = K // 2   # = 3 ("same" padding)


def _make_kernel(NB, C, H, W):
    HW = H * W
    SIDE = PAD * W + PAD          # one-sided zero pad in flattened (H*W) space
    EXT = HW + (K - 1)            # length of each row-shifted slice

    def kernel(w_ref, bias_ref, x_ref, o_ref):
        # x_ref: (NB, C, HW) lane-dense block (HW = 256 -> multiple of 128).
        xf = x_ref[...].astype(jnp.float32)

        # ---- ChannelPool: cat(max over C, mean over C) ----
        pmax = jnp.max(xf, axis=1, keepdims=True)      # (NB, 1, HW)
        pmean = jnp.mean(xf, axis=1, keepdims=True)    # (NB, 1, HW)

        # Zero-pad the flattened pooled maps as values (vertical "same" pad).
        zpad = jnp.zeros((NB, 1, SIDE), jnp.float32)
        padded = [jnp.concatenate([zpad, pmax, zpad], axis=2),   # c=0: max
                  jnp.concatenate([zpad, pmean, zpad], axis=2)]  # c=1: mean

        # Sublane-pack the 2 pooled channels x 7 row shifts: (NB, 14, HW+6).
        # Row r = c*7+dy holds padded[c][dy*W : dy*W + HW + 6]; the dx loop
        # below only needs a lane shift of this dense stack.
        rows = []
        for pc in padded:
            for dy in range(K):
                off = dy * W
                rows.append(pc[:, :, off:off + EXT])
        stacked = jnp.concatenate(rows, axis=1)        # (NB, 14, HW+6)

        # Weight slab (fetched once per grid step): rows 0..13 hold the fused
        # (2,7,7) weights reshaped to (14,7) in lanes 0..6.
        wall = w_ref[...]                               # (16, 128) f32

        # Per-output-column index (for masking horizontal out-of-row taps).
        col = jax.lax.broadcasted_iota(jnp.int32, (1, HW), 1) % W

        # ---- fused 2->1 7x7 "same" conv: 7 dx iterations, 14-sublane dense --
        acc = jnp.zeros((NB, 14, HW), jnp.float32)
        for dx in range(K):
            sx = dx - PAD
            mask = jnp.logical_and(col >= -sx, col < W - sx)        # (1, HW)
            wm = wall[0:2 * K, dx:dx + 1] * jnp.where(mask, 1.0, 0.0)  # (14,HW)
            acc = acc + stacked[:, :, dx:dx + HW] * wm
        z = jnp.sum(acc, axis=1, keepdims=True) + bias_ref[0]       # (NB,1,HW)

        # ---- sigmoid gate: clamp (NaN-safe) + EUP exp + approx recip + NR ----
        zc = jnp.clip(z, -30.0, 30.0)
        denom = 1.0 + jnp.exp(-zc)
        inv = pl.reciprocal(denom, approx=True)
        inv = inv * (2.0 - denom * inv)        # one Newton step -> full f32

        # ---- broadcast gate over channels, lane-dense store ----
        # (If the model ran in bf16, the multiply/store could stay bf16 on
        #  v6e/v7x; inputs here are f32 so compute stays f32.)
        o_ref[...] = (xf * inv).astype(o_ref.dtype)

    return kernel


@jax.jit
def spatial_gate_pallas(x, wslab, bias):
    N, C, H, W = x.shape
    HW = H * W

    # Images per grid step: aim for ~1 MiB blocks (memory-bound kernel), but
    # keep >= 2 parallel grid steps when blocks would still be large enough
    # (keeps both TensorCores busy on v7x).
    per_img = C * HW * x.dtype.itemsize
    nb = max(1, min(N, (1 << 20) // per_img))
    grid_n = pl.cdiv(N, nb)
    if grid_n == 1 and N >= 2 and pl.cdiv(N, 2) * per_img >= (256 << 10):
        nb = pl.cdiv(N, 2)
        grid_n = pl.cdiv(N, nb)

    n_pad = grid_n * nb
    xf = x.reshape(N, C, HW)                 # free relayout -> lane-dense
    if n_pad != N:
        xf = jnp.concatenate(
            [xf, jnp.zeros((n_pad - N, C, HW), x.dtype)], axis=0)

    out = pl.pallas_call(
        _make_kernel(nb, C, H, W),
        out_shape=jax.ShapeDtypeStruct((n_pad, C, HW), x.dtype),
        grid=(grid_n,),
        in_specs=[
            # (16,128) weight slab: constant index_map -> DMA'd once.
            pl.BlockSpec((16, 128), lambda n: (0, 0)),
            # scalar fused bias
            pl.BlockSpec(memory_space=pltpu.MemorySpace.SMEM),
            # NB images per step
            pl.BlockSpec((nb, C, HW), lambda n: (n, 0, 0)),
        ],
        out_specs=pl.BlockSpec((nb, C, HW), lambda n: (n, 0, 0)),
        compiler_params=pltpu.CompilerParams(
            dimension_semantics=("parallel",)),
    )(wslab, bias, xf)
    return out[:N].reshape(N, C, H, W)


def _fold_bn(w, gamma, beta, mean, var, eps=1e-5):
    """Fold eval-mode BatchNorm (1 output channel) into conv weight + offset."""
    scale = gamma / jnp.sqrt(var + eps)
    return w * scale, beta - mean * scale


def _init_params(key):
    """Deterministic synthetic params, BN-folded, fused to one 2x7x7 + bias."""
    ks = jax.random.split(key, 8)
    # conv weights, torch layout (out=1, in, kh, kw)
    w1 = 0.1 * jax.random.normal(ks[0], (1, 2, 3, 3), jnp.float32)
    w2 = 0.1 * jax.random.normal(ks[1], (1, 2, 5, 5), jnp.float32)
    w3 = 0.1 * jax.random.normal(ks[2], (1, 2, 7, 7), jnp.float32)
    w4 = 0.5 * jax.random.normal(ks[3], (1, 3, 1, 1), jnp.float32)
    # BatchNorm(1) params per branch: (gamma, beta, running_mean, running_var)
    bn = []
    for i in range(3):
        g = 1.0 + 0.1 * jax.random.normal(ks[4 + i], (1,), jnp.float32)
        b = 0.1 * jax.random.normal(ks[7], (1,), jnp.float32) * (i + 1)
        m = jnp.array([0.05 * (i + 1)], jnp.float32)
        v = jnp.array([1.0 + 0.1 * i], jnp.float32)
        bn.append((g, b, m, v))

    w1f, b1f = _fold_bn(w1[0], *bn[0])   # (2,3,3), (1,)
    w2f, b2f = _fold_bn(w2[0], *bn[1])   # (2,5,5), (1,)
    w3f, b3f = _fold_bn(w3[0], *bn[2])   # (2,7,7), (1,)
    b4 = jnp.zeros((1,), jnp.float32)    # BasicBlock bias=False -> no conv bias

    # fuse the 1x1 mixing conv + branch biases into one 2x7x7 conv + bias
    a1 = w4[0, 0, 0, 0]
    a2 = w4[0, 1, 0, 0]
    a3 = w4[0, 2, 0, 0]
    wc = a3 * w3f                                   # (2,7,7)
    wc = wc.at[:, 2:5, 2:5].add(a1 * w1f)           # centered 3x3
    wc = wc.at[:, 1:6, 1:6].add(a2 * w2f)           # centered 5x5
    bc = a1 * b1f + a2 * b2f + a3 * b3f + b4        # (1,)

    # (16,128) VMEM weight slab: row c*7+dy holds the 7 dx taps in lanes 0..6.
    wslab = jnp.zeros((16, 128), jnp.float32).at[0:2 * K, 0:K].set(
        wc.reshape(2 * K, K))

    folded = dict(w1=w1f[None], b1=b1f, w2=w2f[None], b2=b2f,
                  w3=w3f[None], b3=b3f, w4=w4, b4=b4)
    return wslab, bc, folded


def _reference(x, p):
    """Pure-JAX reference of SpatialGate.forward (BN folded, UNfused structure)."""
    mx = jnp.max(x, axis=1, keepdims=True)
    mn = jnp.mean(x, axis=1, keepdims=True)
    xc = jnp.concatenate([mx, mn], axis=1)  # (N,2,H,W)

    def conv(inp, w, pad):
        return jax.lax.conv_general_dilated(
            inp, w, (1, 1), [(pad, pad), (pad, pad)],
            dimension_numbers=("NCHW", "OIHW", "NCHW"))

    s1 = conv(xc, p["w1"], 1) + p["b1"].reshape(1, 1, 1, 1)
    s2 = conv(xc, p["w2"], 2) + p["b2"].reshape(1, 1, 1, 1)
    s3 = conv(xc, p["w3"], 3) + p["b3"].reshape(1, 1, 1, 1)
    cat = jnp.concatenate([s1, s2, s3], axis=1)
    z = conv(cat, p["w4"], 0) + p["b4"].reshape(1, 1, 1, 1)
    scale = jax.nn.sigmoid(z)
    return x * scale


if __name__ == "__main__":
    key = jax.random.PRNGKey(0)
    kx, kp = jax.random.split(key)

    N, C, H, W = 2, 4, 16, 16
    x = jax.random.normal(kx, (N, C, H, W), jnp.float32)
    wslab, bias, params_folded = _init_params(kp)

    out = jax.block_until_ready(spatial_gate_pallas(x, wslab, bias))
    ref = _reference(x, params_folded)

    assert out.shape == (N, C, H, W)
    err = float(jnp.max(jnp.abs(out - ref)))
    # tolerance covers the (exact-algebra) fusion reorder + approx-reciprocal NR
    assert jnp.allclose(out, ref, atol=1e-3, rtol=1e-3), err
    print("KERNEL_OK")
</pallas_src>

<mosaic_0001>
module attributes {stable_mosaic.version = 11 : i64} {
  func.func @kernel(%arg0: i32, %arg1: memref<16x128xf32, #tpu.memory_space<vmem>>, %arg2: memref<1xf32, #tpu.memory_space<smem>>, %arg3: memref<2x4x256xf32, #tpu.memory_space<vmem>>, %arg4: memref<2x4x256xf32, #tpu.memory_space<vmem>>) attributes {dimension_semantics = [#tpu.dimension_semantics<parallel>], iteration_bounds = array<i64: 1>, scalar_prefetch = 0 : i64, scratch_operands = 0 : i64, tpu.core_type = #tpu.core_type<tc>, window_params = [{pipeline_mode = #tpu.pipeline_mode<synchronous>, transform_indices = @transform_0, window_bounds = array<i64: 16, 128>}, {transform_indices = @transform_1, window_bounds = array<i64: 1>}, {transform_indices = @transform_2, window_bounds = array<i64: 2, 4, 256>}, {transform_indices = @transform_3, window_bounds = array<i64: 2, 4, 256>}]} {
    %c0 = arith.constant 0 : index
    %c0_0 = arith.constant 0 : index
    %c0_1 = arith.constant 0 : index
    %0 = vector.load %arg3[%c0, %c0_0, %c0_1] : memref<2x4x256xf32, #tpu.memory_space<vmem>>, vector<2x4x256xf32>
    %cst = arith.constant dense<0xFF800000> : vector<2x256xf32>
    %1 = vector.multi_reduction <maximumf>, %0, %cst [1] : vector<2x4x256xf32> to vector<2x256xf32>
    %2 = vector.shape_cast %1 : vector<2x256xf32> to vector<2x1x256xf32>
    %cst_2 = arith.constant dense<0.000000e+00> : vector<2x256xf32>
    %3 = vector.multi_reduction <add>, %0, %cst_2 [1] : vector<2x4x256xf32> to vector<2x256xf32>
    %4 = vector.shape_cast %3 : vector<2x256xf32> to vector<2x1x256xf32>
    %cst_3 = arith.constant 4.000000e+00 : f32
    %5 = vector.broadcast %cst_3 : f32 to vector<2x1x256xf32>
    %6 = arith.divf %4, %5 : vector<2x1x256xf32>
    %cst_4 = arith.constant 0.000000e+00 : f32
    %7 = vector.broadcast %cst_4 : f32 to vector<2x1x51xf32>
    %8 = tpu.concatenate %7, %2, %7 in 2 : vector<2x1x51xf32>, vector<2x1x256xf32>, vector<2x1x51xf32> -> vector<2x1x358xf32>
    %9 = tpu.concatenate %7, %6, %7 in 2 : vector<2x1x51xf32>, vector<2x1x256xf32>, vector<2x1x51xf32> -> vector<2x1x358xf32>
    %10 = vector.extract_strided_slice %8 {offsets = [0, 0, 0], sizes = [2, 1, 262], strides = [1, 1, 1]} : vector<2x1x358xf32> to vector<2x1x262xf32>
    %11 = vector.extract_strided_slice %8 {offsets = [0, 0, 16], sizes = [2, 1, 262], strides = [1, 1, 1]} : vector<2x1x358xf32> to vector<2x1x262xf32>
    %12 = vector.extract_strided_slice %8 {offsets = [0, 0, 32], sizes = [2, 1, 262], strides = [1, 1, 1]} : vector<2x1x358xf32> to vector<2x1x262xf32>
    %13 = vector.extract_strided_slice %8 {offsets = [0, 0, 48], sizes = [2, 1, 262], strides = [1, 1, 1]} : vector<2x1x358xf32> to vector<2x1x262xf32>
    %14 = vector.extract_strided_slice %8 {offsets = [0, 0, 64], sizes = [2, 1, 262], strides = [1, 1, 1]} : vector<2x1x358xf32> to vector<2x1x262xf32>
    %15 = vector.extract_strided_slice %8 {offsets = [0, 0, 80], sizes = [2, 1, 262], strides = [1, 1, 1]} : vector<2x1x358xf32> to vector<2x1x262xf32>
    %16 = vector.extract_strided_slice %8 {offsets = [0, 0, 96], sizes = [2, 1, 262], strides = [1, 1, 1]} : vector<2x1x358xf32> to vector<2x1x262xf32>
    %17 = vector.extract_strided_slice %9 {offsets = [0, 0, 0], sizes = [2, 1, 262], strides = [1, 1, 1]} : vector<2x1x358xf32> to vector<2x1x262xf32>
    %18 = vector.extract_strided_slice %9 {offsets = [0, 0, 16], sizes = [2, 1, 262], strides = [1, 1, 1]} : vector<2x1x358xf32> to vector<2x1x262xf32>
    %19 = vector.extract_strided_slice %9 {offsets = [0, 0, 32], sizes = [2, 1, 262], strides = [1, 1, 1]} : vector<2x1x358xf32> to vector<2x1x262xf32>
    %20 = vector.extract_strided_slice %9 {offsets = [0, 0, 48], sizes = [2, 1, 262], strides = [1, 1, 1]} : vector<2x1x358xf32> to vector<2x1x262xf32>
    %21 = vector.extract_strided_slice %9 {offsets = [0, 0, 64], sizes = [2, 1, 262], strides = [1, 1, 1]} : vector<2x1x358xf32> to vector<2x1x262xf32>
    %22 = vector.extract_strided_slice %9 {offsets = [0, 0, 80], sizes = [2, 1, 262], strides = [1, 1, 1]} : vector<2x1x358xf32> to vector<2x1x262xf32>
    %23 = vector.extract_strided_slice %9 {offsets = [0, 0, 96], sizes = [2, 1, 262], strides = [1, 1, 1]} : vector<2x1x358xf32> to vector<2x1x262xf32>
    %24 = tpu.concatenate %10, %11, %12, %13, %14, %15, %16, %17, %18, %19, %20, %21, %22, %23 in 1 : vector<2x1x262xf32>, vector<2x1x262xf32>, vector<2x1x262xf32>, vector<2x1x262xf32>, vector<2x1x262xf32>, vector<2x1x262xf32>, vector<2x1x262xf32>, vector<2x1x262xf32>, vector<2x1x262xf32>, vector<2x1x262xf32>, vector<2x1x262xf32>, vector<2x1x262xf32>, vector<2x1x262xf32>, vector<2x1x262xf32> -> vector<2x14x262xf32>
    %c0_5 = arith.constant 0 : index
    %c0_6 = arith.constant 0 : index
    %25 = vector.load %arg1[%c0_5, %c0_6] : memref<16x128xf32, #tpu.memory_space<vmem>>, vector<16x128xf32>
    %26 = tpu.iota {dimensions = array<i32: 1>} : vector<1x256xi32>
    %c16_i32 = arith.constant 16 : i32
    %c0_i32 = arith.constant 0 : i32
    %27 = arith.cmpi eq, %c16_i32, %c0_i32 : i32
    %c1_i32 = arith.constant 1 : i32
    %28 = arith.select %27, %c1_i32, %c16_i32 : i32
    %29 = vector.broadcast %28 : i32 to vector<1x256xi32>
    %30 = arith.remsi %26, %29 : vector<1x256xi32>
    %c0_i32_7 = arith.constant 0 : i32
    %31 = vector.broadcast %c0_i32_7 : i32 to vector<1x256xi32>
    %32 = arith.cmpi ne, %30, %31 : vector<1x256xi32>
    %c0_i32_8 = arith.constant 0 : i32
    %33 = vector.broadcast %c0_i32_8 : i32 to vector<1x256xi32>
    %34 = arith.cmpi slt, %30, %33 : vector<1x256xi32>
    %c0_i32_9 = arith.constant 0 : i32
    %35 = arith.cmpi slt, %28, %c0_i32_9 : i32
    %36 = vector.broadcast %35 : i1 to vector<1x256xi1>
    %37 = vector.broadcast %36 : vector<1x256xi1> to vector<1x256xi1>
    %38 = arith.xori %34, %37 : vector<1x256xi1>
    %39 = arith.andi %38, %32 : vector<1x256xi1>
    %40 = vector.broadcast %28 : i32 to vector<1x256xi32>
    %41 = arith.addi %30, %40 : vector<1x256xi32>
    %42 = arith.select %39, %41, %30 : vector<1x256xi1>, vector<1x256xi32>
    %cst_10 = arith.constant 0.000000e+00 : f32
    %43 = vector.broadcast %cst_10 : f32 to vector<2x14x256xf32>
    %c3_i32 = arith.constant 3 : i32
    %44 = vector.broadcast %c3_i32 : i32 to vector<1x256xi32>
    %45 = arith.cmpi sge, %42, %44 : vector<1x256xi32>
    %c19_i32 = arith.constant 19 : i32
    %46 = vector.broadcast %c19_i32 : i32 to vector<1x256xi32>
    %47 = arith.cmpi slt, %42, %46 : vector<1x256xi32>
    %48 = arith.andi %45, %47 : vector<1x256xi1>
    %49 = vector.extract_strided_slice %25 {offsets = [0, 0], sizes = [14, 1], strides = [1, 1]} : vector<16x128xf32> to vector<14x1xf32>
    %cst_11 = arith.constant 1.000000e+00 : f32
    %cst_12 = arith.constant 0.000000e+00 : f32
    %50 = vector.broadcast %cst_11 : f32 to vector<1x256xf32>
    %51 = vector.broadcast %cst_12 : f32 to vector<1x256xf32>
    %52 = arith.select %48, %50, %51 : vector<1x256xi1>, vector<1x256xf32>
    %53 = vector.broadcast %49 : vector<14x1xf32> to vector<14x256xf32>
    %54 = vector.broadcast %52 : vector<1x256xf32> to vector<14x256xf32>
    %55 = arith.mulf %53, %54 : vector<14x256xf32>
    %56 = vector.extract_strided_slice %24 {offsets = [0, 0, 0], sizes = [2, 14, 256], strides = [1, 1, 1]} : vector<2x14x262xf32> to vector<2x14x256xf32>
    %57 = vector.shape_cast %55 : vector<14x256xf32> to vector<1x14x256xf32>
    %58 = vector.broadcast %57 : vector<1x14x256xf32> to vector<2x14x256xf32>
    %59 = arith.mulf %56, %58 : vector<2x14x256xf32>
    %60 = arith.addf %43, %59 : vector<2x14x256xf32>
    %c2_i32 = arith.constant 2 : i32
    %61 = vector.broadcast %c2_i32 : i32 to vector<1x256xi32>
    %62 = arith.cmpi sge, %42, %61 : vector<1x256xi32>
    %c18_i32 = arith.constant 18 : i32
    %63 = vector.broadcast %c18_i32 : i32 to vector<1x256xi32>
    %64 = arith.cmpi slt, %42, %63 : vector<1x256xi32>
    %65 = arith.andi %62, %64 : vector<1x256xi1>
    %66 = vector.extract_strided_slice %25 {offsets = [0, 1], sizes = [14, 1], strides = [1, 1]} : vector<16x128xf32> to vector<14x1xf32>
    %cst_13 = arith.constant 1.000000e+00 : f32
    %cst_14 = arith.constant 0.000000e+00 : f32
    %67 = vector.broadcast %cst_13 : f32 to vector<1x256xf32>
    %68 = vector.broadcast %cst_14 : f32 to vector<1x256xf32>
    %69 = arith.select %65, %67, %68 : vector<1x256xi1>, vector<1x256xf32>
    %70 = vector.broadcast %66 : vector<14x1xf32> to vector<14x256xf32>
    %71 = vector.broadcast %69 : vector<1x256xf32> to vector<14x256xf32>
    %72 = arith.mulf %70, %71 : vector<14x256xf32>
    %73 = vector.extract_strided_slice %24 {offsets = [0, 0, 1], sizes = [2, 14, 256], strides = [1, 1, 1]} : vector<2x14x262xf32> to vector<2x14x256xf32>
    %74 = vector.shape_cast %72 : vector<14x256xf32> to vector<1x14x256xf32>
    %75 = vector.broadcast %74 : vector<1x14x256xf32> to vector<2x14x256xf32>
    %76 = arith.mulf %73, %75 : vector<2x14x256xf32>
    %77 = arith.addf %60, %76 : vector<2x14x256xf32>
    %c1_i32_15 = arith.constant 1 : i32
    %78 = vector.broadcast %c1_i32_15 : i32 to vector<1x256xi32>
    %79 = arith.cmpi sge, %42, %78 : vector<1x256xi32>
    %c17_i32 = arith.constant 17 : i32
    %80 = vector.broadcast %c17_i32 : i32 to vector<1x256xi32>
    %81 = arith.cmpi slt, %42, %80 : vector<1x256xi32>
    %82 = arith.andi %79, %81 : vector<1x256xi1>
    %83 = vector.extract_strided_slice %25 {offsets = [0, 2], sizes = [14, 1], strides = [1, 1]} : vector<16x128xf32> to vector<14x1xf32>
    %cst_16 = arith.constant 1.000000e+00 : f32
    %cst_17 = arith.constant 0.000000e+00 : f32
    %84 = vector.broadcast %cst_16 : f32 to vector<1x256xf32>
    %85 = vector.broadcast %cst_17 : f32 to vector<1x256xf32>
    %86 = arith.select %82, %84, %85 : vector<1x256xi1>, vector<1x256xf32>
    %87 = vector.broadcast %83 : vector<14x1xf32> to vector<14x256xf32>
    %88 = vector.broadcast %86 : vector<1x256xf32> to vector<14x256xf32>
    %89 = arith.mulf %87, %88 : vector<14x256xf32>
    %90 = vector.extract_strided_slice %24 {offsets = [0, 0, 2], sizes = [2, 14, 256], strides = [1, 1, 1]} : vector<2x14x262xf32> to vector<2x14x256xf32>
    %91 = vector.shape_cast %89 : vector<14x256xf32> to vector<1x14x256xf32>
    %92 = vector.broadcast %91 : vector<1x14x256xf32> to vector<2x14x256xf32>
    %93 = arith.mulf %90, %92 : vector<2x14x256xf32>
    %94 = arith.addf %77, %93 : vector<2x14x256xf32>
    %c0_i32_18 = arith.constant 0 : i32
    %95 = vector.broadcast %c0_i32_18 : i32 to vector<1x256xi32>
    %96 = arith.cmpi sge, %42, %95 : vector<1x256xi32>
    %c16_i32_19 = arith.constant 16 : i32
    %97 = vector.broadcast %c16_i32_19 : i32 to vector<1x256xi32>
    %98 = arith.cmpi slt, %42, %97 : vector<1x256xi32>
    %99 = arith.andi %96, %98 : vector<1x256xi1>
    %100 = vector.extract_strided_slice %25 {offsets = [0, 3], sizes = [14, 1], strides = [1, 1]} : vector<16x128xf32> to vector<14x1xf32>
    %cst_20 = arith.constant 1.000000e+00 : f32
    %cst_21 = arith.constant 0.000000e+00 : f32
    %101 = vector.broadcast %cst_20 : f32 to vector<1x256xf32>
    %102 = vector.broadcast %cst_21 : f32 to vector<1x256xf32>
    %103 = arith.select %99, %101, %102 : vector<1x256xi1>, vector<1x256xf32>
    %104 = vector.broadcast %100 : vector<14x1xf32> to vector<14x256xf32>
    %105 = vector.broadcast %103 : vector<1x256xf32> to vector<14x256xf32>
    %106 = arith.mulf %104, %105 : vector<14x256xf32>
    %107 = vector.extract_strided_slice %24 {offsets = [0, 0, 3], sizes = [2, 14, 256], strides = [1, 1, 1]} : vector<2x14x262xf32> to vector<2x14x256xf32>
    %108 = vector.shape_cast %106 : vector<14x256xf32> to vector<1x14x256xf32>
    %109 = vector.broadcast %108 : vector<1x14x256xf32> to vector<2x14x256xf32>
    %110 = arith.mulf %107, %109 : vector<2x14x256xf32>
    %111 = arith.addf %94, %110 : vector<2x14x256xf32>
    %c-1_i32 = arith.constant -1 : i32
    %112 = vector.broadcast %c-1_i32 : i32 to vector<1x256xi32>
    %113 = arith.cmpi sge, %42, %112 : vector<1x256xi32>
    %c15_i32 = arith.constant 15 : i32
    %114 = vector.broadcast %c15_i32 : i32 to vector<1x256xi32>
    %115 = arith.cmpi slt, %42, %114 : vector<1x256xi32>
    %116 = arith.andi %113, %115 : vector<1x256xi1>
    %117 = vector.extract_strided_slice %25 {offsets = [0, 4], sizes = [14, 1], strides = [1, 1]} : vector<16x128xf32> to vector<14x1xf32>
    %cst_22 = arith.constant 1.000000e+00 : f32
    %cst_23 = arith.constant 0.000000e+00 : f32
    %118 = vector.broadcast %cst_22 : f32 to vector<1x256xf32>
    %119 = vector.broadcast %cst_23 : f32 to vector<1x256xf32>
    %120 = arith.select %116, %118, %119 : vector<1x256xi1>, vector<1x256xf32>
    %121 = vector.broadcast %117 : vector<14x1xf32> to vector<14x256xf32>
    %122 = vector.broadcast %120 : vector<1x256xf32> to vector<14x256xf32>
    %123 = arith.mulf %121, %122 : vector<14x256xf32>
    %124 = vector.extract_strided_slice %24 {offsets = [0, 0, 4], sizes = [2, 14, 256], strides = [1, 1, 1]} : vector<2x14x262xf32> to vector<2x14x256xf32>
    %125 = vector.shape_cast %123 : vector<14x256xf32> to vector<1x14x256xf32>
    %126 = vector.broadcast %125 : vector<1x14x256xf32> to vector<2x14x256xf32>
    %127 = arith.mulf %124, %126 : vector<2x14x256xf32>
    %128 = arith.addf %111, %127 : vector<2x14x256xf32>
    %c-2_i32 = arith.constant -2 : i32
    %129 = vector.broadcast %c-2_i32 : i32 to vector<1x256xi32>
    %130 = arith.cmpi sge, %42, %129 : vector<1x256xi32>
    %c14_i32 = arith.constant 14 : i32
    %131 = vector.broadcast %c14_i32 : i32 to vector<1x256xi32>
    %132 = arith.cmpi slt, %42, %131 : vector<1x256xi32>
    %133 = arith.andi %130, %132 : vector<1x256xi1>
    %134 = vector.extract_strided_slice %25 {offsets = [0, 5], sizes = [14, 1], strides = [1, 1]} : vector<16x128xf32> to vector<14x1xf32>
    %cst_24 = arith.constant 1.000000e+00 : f32
    %cst_25 = arith.constant 0.000000e+00 : f32
    %135 = vector.broadcast %cst_24 : f32 to vector<1x256xf32>
    %136 = vector.broadcast %cst_25 : f32 to vector<1x256xf32>
    %137 = arith.select %133, %135, %136 : vector<1x256xi1>, vector<1x256xf32>
    %138 = vector.broadcast %134 : vector<14x1xf32> to vector<14x256xf32>
    %139 = vector.broadcast %137 : vector<1x256xf32> to vector<14x256xf32>
    %140 = arith.mulf %138, %139 : vector<14x256xf32>
    %141 = vector.extract_strided_slice %24 {offsets = [0, 0, 5], sizes = [2, 14, 256], strides = [1, 1, 1]} : vector<2x14x262xf32> to vector<2x14x256xf32>
    %142 = vector.shape_cast %140 : vector<14x256xf32> to vector<1x14x256xf32>
    %143 = vector.broadcast %142 : vector<1x14x256xf32> to vector<2x14x256xf32>
    %144 = arith.mulf %141, %143 : vector<2x14x256xf32>
    %145 = arith.addf %128, %144 : vector<2x14x256xf32>
    %c-3_i32 = arith.constant -3 : i32
    %146 = vector.broadcast %c-3_i32 : i32 to vector<1x256xi32>
    %147 = arith.cmpi sge, %42, %146 : vector<1x256xi32>
    %c13_i32 = arith.constant 13 : i32
    %148 = vector.broadcast %c13_i32 : i32 to vector<1x256xi32>
    %149 = arith.cmpi slt, %42, %148 : vector<1x256xi32>
    %150 = arith.andi %147, %149 : vector<1x256xi1>
    %151 = vector.extract_strided_slice %25 {offsets = [0, 6], sizes = [14, 1], strides = [1, 1]} : vector<16x128xf32> to vector<14x1xf32>
    %cst_26 = arith.constant 1.000000e+00 : f32
    %cst_27 = arith.constant 0.000000e+00 : f32
    %152 = vector.broadcast %cst_26 : f32 to vector<1x256xf32>
    %153 = vector.broadcast %cst_27 : f32 to vector<1x256xf32>
    %154 = arith.select %150, %152, %153 : vector<1x256xi1>, vector<1x256xf32>
    %155 = vector.broadcast %151 : vector<14x1xf32> to vector<14x256xf32>
    %156 = vector.broadcast %154 : vector<1x256xf32> to vector<14x256xf32>
    %157 = arith.mulf %155, %156 : vector<14x256xf32>
    %158 = vector.extract_strided_slice %24 {offsets = [0, 0, 6], sizes = [2, 14, 256], strides = [1, 1, 1]} : vector<2x14x262xf32> to vector<2x14x256xf32>
    %159 = vector.shape_cast %157 : vector<14x256xf32> to vector<1x14x256xf32>
    %160 = vector.broadcast %159 : vector<1x14x256xf32> to vector<2x14x256xf32>
    %161 = arith.mulf %158, %160 : vector<2x14x256xf32>
    %162 = arith.addf %145, %161 : vector<2x14x256xf32>
    %cst_28 = arith.constant dense<0.000000e+00> : vector<2x256xf32>
    %163 = vector.multi_reduction <add>, %162, %cst_28 [1] : vector<2x14x256xf32> to vector<2x256xf32>
    %164 = vector.shape_cast %163 : vector<2x256xf32> to vector<2x1x256xf32>
    %c0_29 = arith.constant 0 : index
    %165 = memref.load %arg2[%c0_29] : memref<1xf32, #tpu.memory_space<smem>>
    %166 = vector.broadcast %165 : f32 to vector<2x1x256xf32>
    %167 = arith.addf %164, %166 : vector<2x1x256xf32>
    %cst_30 = arith.constant -3.000000e+01 : f32
    %cst_31 = arith.constant 3.000000e+01 : f32
    %168 = vector.broadcast %cst_30 : f32 to vector<2x1x256xf32>
    %169 = arith.maximumf %168, %167 : vector<2x1x256xf32>
    %170 = vector.broadcast %cst_31 : f32 to vector<2x1x256xf32>
    %171 = arith.minimumf %170, %169 : vector<2x1x256xf32>
    %cst_32 = arith.constant 0.000000e+00 : f32
    %172 = vector.broadcast %cst_32 : f32 to vector<2x1x256xf32>
    %173 = arith.subf %172, %171 : vector<2x1x256xf32>
    %174 = math.exp %173 : vector<2x1x256xf32>
    %cst_33 = arith.constant 1.000000e+00 : f32
    %175 = vector.broadcast %cst_33 : f32 to vector<2x1x256xf32>
    %176 = arith.addf %175, %174 : vector<2x1x256xf32>
    %177 = tpu.reciprocal %176 {approx = true} : vector<2x1x256xf32> -> vector<2x1x256xf32>
    %178 = arith.mulf %176, %177 : vector<2x1x256xf32>
    %cst_34 = arith.constant 2.000000e+00 : f32
    %179 = vector.broadcast %cst_34 : f32 to vector<2x1x256xf32>
    %180 = arith.subf %179, %178 : vector<2x1x256xf32>
    %181 = arith.mulf %177, %180 : vector<2x1x256xf32>
    %182 = vector.broadcast %181 : vector<2x1x256xf32> to vector<2x4x256xf32>
    %183 = arith.mulf %0, %182 : vector<2x4x256xf32>
    %c0_35 = arith.constant 0 : index
    %c0_36 = arith.constant 0 : index
    %c0_37 = arith.constant 0 : index
    %184 = vector.load %arg4[%c0_35, %c0_36, %c0_37] : memref<2x4x256xf32, #tpu.memory_space<vmem>>, vector<2x4x256xf32>
    tpu.vector_store %arg4[%c0_35, %c0_36, %c0_37], %183 {strides = array<i32>} : memref<2x4x256xf32, #tpu.memory_space<vmem>>, vector<2x4x256xf32>,
    return
  }
  func.func @transform_0(%arg0: i32) -> (i32, i32) {
    %c0_i32 = arith.constant 0 : i32
    %c0_i32_0 = arith.constant 0 : i32
    %c0_i32_1 = arith.constant 0 : i32
    return %c0_i32, %c0_i32_0 : i32, i32
  }
  func.func @transform_1(%arg0: i32) -> i32 {
    %c0_i32 = arith.constant 0 : i32
    %c0_i32_0 = arith.constant 0 : i32
    return %c0_i32 : i32
  }
  func.func @transform_2(%arg0: i32) -> (i32, i32, i32) {
    %c0_i32 = arith.constant 0 : i32
    %c0_i32_0 = arith.constant 0 : i32
    %c0_i32_1 = arith.constant 0 : i32
    return %arg0, %c0_i32, %c0_i32_0 : i32, i32, i32
  }
  func.func @transform_3(%arg0: i32) -> (i32, i32, i32) {
    %c0_i32 = arith.constant 0 : i32
    %c0_i32_0 = arith.constant 0 : i32
    %c0_i32_1 = arith.constant 0 : i32
    return %arg0, %c0_i32, %c0_i32_0 : i32, i32, i32
  }
}

</mosaic_0001>

<llo_original>
// kernel: spatial_gate_pallas.1
$region0: #{spatial_gate_pallas.1}
  #allocation0 [shape = 'u32[]', space=smem, size = 0x4, offset = 0x4, fixed_abs, tag = 'smem constant byte address 0x4 - core index']
  #allocation1 [shape = 'u32[144,128]{1,0:T(1,128)}', space=vmem, size = 0x12000, scoped, tag = 'internal scratch']
  #allocation2 [shape = 'f32[1]{0:T(128)S(6)}', space=smem, size = 0x200, scoped, tag = 'scoped memory for spatial_gate_pallas.1']
  %s0 = inlined_call_operand.vmem [shape: f32[16,128], index: 0, kind: input, shape index: {}]
  %s1 = inlined_call_operand.<no memory space> [shape: f32[1], index: 1, kind: input, shape index: {}]
  %s2 = inlined_call_operand.vmem [shape: f32[2,4,256], index: 2, kind: input, shape index: {}]
  %s3 = inlined_call_operand.vmem [shape: f32[2,4,256], index: 3, kind: output, shape index: {}]
  %s4 = sld [smem:[#allocation0]]
  $region22: #{spatial_gate_pallas.1} parent=0
    _
  %s6 = ssub.s32 1, %s4
  %s7 = scalar_select 0, %s6, %s4
  %8 = sst [smem:[#allocation2]] %s1
  // Predicated region
  $region2: #{spatial_gate_pallas.1} parent=0 // pred_check
    _
  $region3: #{spatial_gate_pallas.1} parent=0 // pred_check_branch
    %10 = sbr.rel (0) target = $region5
  $region4: #{spatial_gate_pallas.1} parent=0 // pred_region
    _
  $region5: #{spatial_gate_pallas.1} parent=0 // pred_fallthru
    _
  // Predicated region
  $region6: #{spatial_gate_pallas.1} parent=0 // pred_check
    _
  $region7: #{spatial_gate_pallas.1} parent=0 // pred_check_branch
    %12 = sbr.rel (0) target = $region9
  $region8: #{spatial_gate_pallas.1} parent=0 // pred_region
    _
  $region9: #{spatial_gate_pallas.1} parent=0 // pred_fallthru
    _
  // Predicated region
  $region10: #{spatial_gate_pallas.1} parent=0 // pred_check
    _
  $region11: #{spatial_gate_pallas.1} parent=0 // pred_check_branch
    %14 = sbr.rel (0) target = $region13
  $region12: #{spatial_gate_pallas.1} parent=0 // pred_region
    _
  $region13: #{spatial_gate_pallas.1} parent=0 // pred_fallthru
    _
  %v15 = vld [vmem:[%s2] sm:$0xff]
  %v16 = vld [vmem:[%s2 + $0x8] sm:$0xff]
  %v19 = vcombine.high %v15, %v15
  %v20 = vcombine.high %v16, %v16
  %vm23 = vcmask 1043456
  %v24 = vsel %vm23, %v15, -inf
  %v25 = vrot.slane %v24, 4
  %v26 = vmax.f32 %v24, %v25
  %v27 = vrot.slane %v26, 2
  %v28 = vmax.f32 %v26, %v27
  %v29 = vrot.slane %v28, 1
  %v30 = vmax.f32 %v28, %v29
  %v31 = vsel %vm23, %v19, -inf
  %v32 = vrot.slane %v31, 4
  %v33 = vmax.f32 %v31, %v32
  %v34 = vrot.slane %v33, 2
  %v35 = vmax.f32 %v33, %v34
  %v36 = vrot.slane %v35, 1
  %v37 = vmax.f32 %v35, %v36
  %v38 = vsel %vm23, %v16, -inf
  %v39 = vrot.slane %v38, 4
  %v40 = vmax.f32 %v38, %v39
  %v41 = vrot.slane %v40, 2
  %v42 = vmax.f32 %v40, %v41
  %v43 = vrot.slane %v42, 1
  %v44 = vmax.f32 %v42, %v43
  %v45 = vsel %vm23, %v20, -inf
  %v46 = vrot.slane %v45, 4
  %v47 = vmax.f32 %v45, %v46
  %v48 = vrot.slane %v47, 2
  %v49 = vmax.f32 %v47, %v48
  %v50 = vrot.slane %v49, 1
  %v51 = vmax.f32 %v49, %v50
  %v52 = vsel %vm23, %v15, 0.0
  %v53 = vrot.slane %v52, 4
  %v54 = vadd.f32 %v52, %v53
  %v55 = vrot.slane %v54, 2
  %v56 = vadd.f32 %v54, %v55
  %v57 = vrot.slane %v56, 1
  %v58 = vadd.f32 %v56, %v57
  %v59 = vsel %vm23, %v19, 0.0
  %v60 = vrot.slane %v59, 4
  %v61 = vadd.f32 %v59, %v60
  %v62 = vrot.slane %v61, 2
  %v63 = vadd.f32 %v61, %v62
  %v64 = vrot.slane %v63, 1
  %v65 = vadd.f32 %v63, %v64
  %v66 = vsel %vm23, %v16, 0.0
  %v67 = vrot.slane %v66, 4
  %v68 = vadd.f32 %v66, %v67
  %v69 = vrot.slane %v68, 2
  %v70 = vadd.f32 %v68, %v69
  %v71 = vrot.slane %v70, 1
  %v72 = vadd.f32 %v70, %v71
  %v73 = vsel %vm23, %v20, 0.0
  %v74 = vrot.slane %v73, 4
  %v75 = vadd.f32 %v73, %v74
  %v76 = vrot.slane %v75, 2
  %v77 = vadd.f32 %v75, %v76
  %v78 = vrot.slane %v77, 1
  %v79 = vadd.f32 %v77, %v78
  %v80 = vrcp.pop 4.0
  %v81 = vmul.f32 %v58, %v80
  %v82 = vmul.f32 %v65, %v80
  %v83 = vmul.f32 %v72, %v80
  %v84 = vmul.f32 %v79, %v80
  %89 = vrot.lane.b32.xlu0 %v30, 51
  %v90 = vpop.permute.xlu0 %89
  %91 = vrot.lane.b32.xlu0 %v37, 51
  %v92 = vpop.permute.xlu0 %91
  %93 = vrot.lane.b32.xlu0 %v44, 51
  %v94 = vpop.permute.xlu0 %93
  %95 = vrot.lane.b32.xlu0 %v51, 51
  %v96 = vpop.permute.xlu0 %95
  %vm97 = vcmask 416768
  %v98 = vsel %vm97, %v90, %v92
  %v99 = vsel %vm97, %v94, %v96
  %v106 = vsel %vm97, 0.0, %v90
  %v107 = vsel %vm97, 0.0, %v94
  %v108 = vsel %vm97, %v92, 0.0
  %v109 = vsel %vm97, %v96, 0.0
  %114 = vrot.lane.b32.xlu0 %v81, 51
  %v115 = vpop.permute.xlu0 %114
  %116 = vrot.lane.b32.xlu0 %v82, 51
  %v117 = vpop.permute.xlu0 %116
  %118 = vrot.lane.b32.xlu0 %v83, 51
  %v119 = vpop.permute.xlu0 %118
  %120 = vrot.lane.b32.xlu0 %v84, 51
  %v121 = vpop.permute.xlu0 %120
  %v122 = vsel %vm97, %v115, %v117
  %v123 = vsel %vm97, %v119, %v121
  %v128 = vsel %vm97, 0.0, %v115
  %v129 = vsel %vm97, 0.0, %v119
  %v130 = vsel %vm97, %v117, 0.0
  %v131 = vsel %vm97, %v121, 0.0
  %v136 = vrot.slane %v106, 7
  %v137 = vrot.slane %v98, 7
  %v138 = vrot.slane %v108, 7
  %v139 = vrot.slane %v107, 7
  %v140 = vrot.slane %v99, 7
  %v141 = vrot.slane %v109, 7
  %142 = vrot.lane.b32.xlu0 %v136, 112
  %v143 = vpop.permute.xlu0 %142
  %144 = vrot.lane.b32.xlu0 %v137, 112
  %v145 = vpop.permute.xlu0 %144
  %146 = vrot.lane.b32.xlu0 %v138, 112
  %v147 = vpop.permute.xlu0 %146
  %148 = vrot.lane.b32.xlu0 %v139, 112
  %v149 = vpop.permute.xlu0 %148
  %150 = vrot.lane.b32.xlu0 %v140, 112
  %v151 = vpop.permute.xlu0 %150
  %152 = vrot.lane.b32.xlu0 %v141, 112
  %v153 = vpop.permute.xlu0 %152
  %vm154 = vcmask 916480
  %v155 = vsel %vm154, %v143, %v145
  %v156 = vsel %vm154, %v145, %v147
  %v157 = vsel %vm154, %v149, %v151
  %v158 = vsel %vm154, %v151, %v153
  %v165 = vrot.slane %v106, 6
  %v166 = vrot.slane %v98, 6
  %v167 = vrot.slane %v108, 6
  %v168 = vrot.slane %v107, 6
  %v169 = vrot.slane %v99, 6
  %v170 = vrot.slane %v109, 6
  %171 = vrot.lane.b32.xlu0 %v165, 96
  %v172 = vpop.permute.xlu0 %171
  %173 = vrot.lane.b32.xlu0 %v166, 96
  %v174 = vpop.permute.xlu0 %173
  %175 = vrot.lane.b32.xlu0 %v167, 96
  %v176 = vpop.permute.xlu0 %175
  %177 = vrot.lane.b32.xlu0 %v168, 96
  %v178 = vpop.permute.xlu0 %177
  %179 = vrot.lane.b32.xlu0 %v169, 96
  %v180 = vpop.permute.xlu0 %179
  %181 = vrot.lane.b32.xlu0 %v170, 96
  %v182 = vpop.permute.xlu0 %181
  %vm183 = vcmask 785408
  %v184 = vsel %vm183, %v172, %v174
  %v185 = vsel %vm183, %v174, %v176
  %v186 = vsel %vm183, %v178, %v180
  %v187 = vsel %vm183, %v180, %v182
  %v194 = vrot.slane %v106, 5
  %v195 = vrot.slane %v98, 5
  %v196 = vrot.slane %v108, 5
  %v197 = vrot.slane %v107, 5
  %v198 = vrot.slane %v99, 5
  %v199 = vrot.slane %v109, 5
  %200 = vrot.lane.b32.xlu0 %v194, 80
  %v201 = vpop.permute.xlu0 %200
  %202 = vrot.lane.b32.xlu0 %v195, 80
  %v203 = vpop.permute.xlu0 %202
  %204 = vrot.lane.b32.xlu0 %v196, 80
  %v205 = vpop.permute.xlu0 %204
  %206 = vrot.lane.b32.xlu0 %v197, 80
  %v207 = vpop.permute.xlu0 %206
  %208 = vrot.lane.b32.xlu0 %v198, 80
  %v209 = vpop.permute.xlu0 %208
  %210 = vrot.lane.b32.xlu0 %v199, 80
  %v211 = vpop.permute.xlu0 %210
  %vm212 = vcmask 654336
  %v213 = vsel %vm212, %v201, %v203
  %v214 = vsel %vm212, %v203, %v205
  %v215 = vsel %vm212, %v207, %v209
  %v216 = vsel %vm212, %v209, %v211
  %v223 = vrot.slane %v106, 4
  %v224 = vrot.slane %v98, 4
  %v225 = vrot.slane %v108, 4
  %v226 = vrot.slane %v107, 4
  %v227 = vrot.slane %v99, 4
  %v228 = vrot.slane %v109, 4
  %229 = vrot.lane.b32.xlu0 %v223, 64
  %v230 = vpop.permute.xlu0 %229
  %231 = vrot.lane.b32.xlu0 %v224, 64
  %v232 = vpop.permute.xlu0 %231
  %233 = vrot.lane.b32.xlu0 %v225, 64
  %v234 = vpop.permute.xlu0 %233
  %235 = vrot.lane.b32.xlu0 %v226, 64
  %v236 = vpop.permute.xlu0 %235
  %237 = vrot.lane.b32.xlu0 %v227, 64
  %v238 = vpop.permute.xlu0 %237
  %239 = vrot.lane.b32.xlu0 %v228, 64
  %v240 = vpop.permute.xlu0 %239
  %vm241 = vcmask 523264
  %v242 = vsel %vm241, %v230, %v232
  %v243 = vsel %vm241, %v232, %v234
  %v244 = vsel %vm241, %v236, %v238
  %v245 = vsel %vm241, %v238, %v240
  %v252 = vrot.slane %v106, 3
  %v253 = vrot.slane %v98, 3
  %v254 = vrot.slane %v108, 3
  %v255 = vrot.slane %v107, 3
  %v256 = vrot.slane %v99, 3
  %v257 = vrot.slane %v109, 3
  %258 = vrot.lane.b32.xlu0 %v252, 48
  %v259 = vpop.permute.xlu0 %258
  %260 = vrot.lane.b32.xlu0 %v253, 48
  %v261 = vpop.permute.xlu0 %260
  %262 = vrot.lane.b32.xlu0 %v254, 48
  %v263 = vpop.permute.xlu0 %262
  %264 = vrot.lane.b32.xlu0 %v255, 48
  %v265 = vpop.permute.xlu0 %264
  %266 = vrot.lane.b32.xlu0 %v256, 48
  %v267 = vpop.permute.xlu0 %266
  %268 = vrot.lane.b32.xlu0 %v257, 48
  %v269 = vpop.permute.xlu0 %268
  %vm270 = vcmask 392192
  %v271 = vsel %vm270, %v259, %v261
  %v272 = vsel %vm270, %v261, %v263
  %v273 = vsel %vm270, %v265, %v267
  %v274 = vsel %vm270, %v267, %v269
  %v281 = vrot.slane %v106, 2
  %v282 = vrot.slane %v98, 2
  %v283 = vrot.slane %v108, 2
  %v284 = vrot.slane %v107, 2
  %v285 = vrot.slane %v99, 2
  %v286 = vrot.slane %v109, 2
  %287 = vrot.lane.b32.xlu0 %v281, 32
  %v288 = vpop.permute.xlu0 %287
  %289 = vrot.lane.b32.xlu0 %v282, 32
  %v290 = vpop.permute.xlu0 %289
  %291 = vrot.lane.b32.xlu0 %v283, 32
  %v292 = vpop.permute.xlu0 %291
  %293 = vrot.lane.b32.xlu0 %v284, 32
  %v294 = vpop.permute.xlu0 %293
  %295 = vrot.lane.b32.xlu0 %v285, 32
  %v296 = vpop.permute.xlu0 %295
  %297 = vrot.lane.b32.xlu0 %v286, 32
  %v298 = vpop.permute.xlu0 %297
  %vm299 = vcmask 261120
  %v300 = vsel %vm299, %v288, %v290
  %v301 = vsel %vm299, %v290, %v292
  %v302 = vsel %vm299, %v294, %v296
  %v303 = vsel %vm299, %v296, %v298
  %v314 = vrot.slane %v128, 1
  %v315 = vrot.slane %v122, 1
  %v316 = vrot.slane %v130, 1
  %v317 = vrot.slane %v129, 1
  %v318 = vrot.slane %v123, 1
  %v319 = vrot.slane %v131, 1
  %326 = vrot.lane.b32.xlu0 %v128, 112
  %v327 = vpop.permute.xlu0 %326
  %328 = vrot.lane.b32.xlu0 %v122, 112
  %v329 = vpop.permute.xlu0 %328
  %330 = vrot.lane.b32.xlu0 %v130, 112
  %v331 = vpop.permute.xlu0 %330
  %332 = vrot.lane.b32.xlu0 %v129, 112
  %v333 = vpop.permute.xlu0 %332
  %334 = vrot.lane.b32.xlu0 %v123, 112
  %v335 = vpop.permute.xlu0 %334
  %336 = vrot.lane.b32.xlu0 %v131, 112
  %v337 = vpop.permute.xlu0 %336
  %v338 = vsel %vm154, %v327, %v329
  %v339 = vsel %vm154, %v329, %v331
  %v340 = vsel %vm154, %v333, %v335
  %v341 = vsel %vm154, %v335, %v337
  %v348 = vrot.slane %v128, 7
  %v349 = vrot.slane %v122, 7
  %v350 = vrot.slane %v130, 7
  %v351 = vrot.slane %v129, 7
  %v352 = vrot.slane %v123, 7
  %v353 = vrot.slane %v131, 7
  %354 = vrot.lane.b32.xlu0 %v348, 96
  %v355 = vpop.permute.xlu0 %354
  %356 = vrot.lane.b32.xlu0 %v349, 96
  %v357 = vpop.permute.xlu0 %356
  %358 = vrot.lane.b32.xlu0 %v350, 96
  %v359 = vpop.permute.xlu0 %358
  %360 = vrot.lane.b32.xlu0 %v351, 96
  %v361 = vpop.permute.xlu0 %360
  %362 = vrot.lane.b32.xlu0 %v352, 96
  %v363 = vpop.permute.xlu0 %362
  %364 = vrot.lane.b32.xlu0 %v353, 96
  %v365 = vpop.permute.xlu0 %364
  %v366 = vsel %vm183, %v355, %v357
  %v367 = vsel %vm183, %v357, %v359
  %v368 = vsel %vm183, %v361, %v363
  %v369 = vsel %vm183, %v363, %v365
  %v376 = vrot.slane %v128, 6
  %v377 = vrot.slane %v122, 6
  %v378 = vrot.slane %v130, 6
  %v379 = vrot.slane %v129, 6
  %v380 = vrot.slane %v123, 6
  %v381 = vrot.slane %v131, 6
  %382 = vrot.lane.b32.xlu0 %v376, 80
  %v383 = vpop.permute.xlu0 %382
  %384 = vrot.lane.b32.xlu0 %v377, 80
  %v385 = vpop.permute.xlu0 %384
  %386 = vrot.lane.b32.xlu0 %v378, 80
  %v387 = vpop.permute.xlu0 %386
  %388 = vrot.lane.b32.xlu0 %v379, 80
  %v389 = vpop.permute.xlu0 %388
  %390 = vrot.lane.b32.xlu0 %v380, 80
  %v391 = vpop.permute.xlu0 %390
  %392 = vrot.lane.b32.xlu0 %v381, 80
  %v393 = vpop.permute.xlu0 %392
  %v394 = vsel %vm212, %v383, %v385
  %v395 = vsel %vm212, %v385, %v387
  %v396 = vsel %vm212, %v389, %v391
  %v397 = vsel %vm212, %v391, %v393
  %v404 = vrot.slane %v128, 5
  %v405 = vrot.slane %v122, 5
  %v406 = vrot.slane %v130, 5
  %v407 = vrot.slane %v129, 5
  %v408 = vrot.slane %v123, 5
  %v409 = vrot.slane %v131, 5
  %410 = vrot.lane.b32.xlu0 %v404, 64
  %v411 = vpop.permute.xlu0 %410
  %412 = vrot.lane.b32.xlu0 %v405, 64
  %v413 = vpop.permute.xlu0 %412
  %414 = vrot.lane.b32.xlu0 %v406, 64
  %v415 = vpop.permute.xlu0 %414
  %416 = vrot.lane.b32.xlu0 %v407, 64
  %v417 = vpop.permute.xlu0 %416
  %418 = vrot.lane.b32.xlu0 %v408, 64
  %v419 = vpop.permute.xlu0 %418
  %420 = vrot.lane.b32.xlu0 %v409, 64
  %v421 = vpop.permute.xlu0 %420
  %v422 = vsel %vm241, %v411, %v413
  %v423 = vsel %vm241, %v413, %v415
  %v424 = vsel %vm241, %v417, %v419
  %v425 = vsel %vm241, %v419, %v421
  %v432 = vrot.slane %v128, 4
  %v433 = vrot.slane %v122, 4
  %v434 = vrot.slane %v130, 4
  %v435 = vrot.slane %v129, 4
  %v436 = vrot.slane %v123, 4
  %v437 = vrot.slane %v131, 4
  %438 = vrot.lane.b32.xlu0 %v432, 48
  %v439 = vpop.permute.xlu0 %438
  %440 = vrot.lane.b32.xlu0 %v433, 48
  %v441 = vpop.permute.xlu0 %440
  %442 = vrot.lane.b32.xlu0 %v434, 48
  %v443 = vpop.permute.xlu0 %442
  %444 = vrot.lane.b32.xlu0 %v435, 48
  %v445 = vpop.permute.xlu0 %444
  %446 = vrot.lane.b32.xlu0 %v436, 48
  %v447 = vpop.permute.xlu0 %446
  %448 = vrot.lane.b32.xlu0 %v437, 48
  %v449 = vpop.permute.xlu0 %448
  %v450 = vsel %vm270, %v439, %v441
  %v451 = vsel %vm270, %v441, %v443
  %v452 = vsel %vm270, %v445, %v447
  %v453 = vsel %vm270, %v447, %v449
  %v460 = vrot.slane %v128, 3
  %v461 = vrot.slane %v122, 3
  %v462 = vrot.slane %v130, 3
  %v463 = vrot.slane %v129, 3
  %v464 = vrot.slane %v123, 3
  %v465 = vrot.slane %v131, 3
  %466 = vrot.lane.b32.xlu0 %v460, 32
  %v467 = vpop.permute.xlu0 %466
  %468 = vrot.lane.b32.xlu0 %v461, 32
  %v469 = vpop.permute.xlu0 %468
  %470 = vrot.lane.b32.xlu0 %v462, 32
  %v471 = vpop.permute.xlu0 %470
  %472 = vrot.lane.b32.xlu0 %v463, 32
  %v473 = vpop.permute.xlu0 %472
  %474 = vrot.lane.b32.xlu0 %v464, 32
  %v475 = vpop.permute.xlu0 %474
  %476 = vrot.lane.b32.xlu0 %v465, 32
  %v477 = vpop.permute.xlu0 %476
  %v478 = vsel %vm299, %v467, %v469
  %v479 = vsel %vm299, %v469, %v471
  %v480 = vsel %vm299, %v473, %v475
  %v481 = vsel %vm299, %v475, %v477
  %vm488 = vcmask 1040384
  %v489 = vsel %vm488, %v106, %v155
  %v490 = vsel %vm488, %v98, %v156
  %v491 = vsel %vm488, %v108, %v147
  %v492 = vsel %vm488, %v107, %v157
  %v493 = vsel %vm488, %v99, %v158
  %v494 = vsel %vm488, %v109, %v153
  %vm495 = vcmask 1041408
  %v496 = vsel %vm495, %v489, %v184
  %v497 = vsel %vm495, %v490, %v185
  %v498 = vsel %vm495, %v491, %v176
  %v499 = vsel %vm495, %v492, %v186
  %v500 = vsel %vm495, %v493, %v187
  %v501 = vsel %vm495, %v494, %v182
  %vm502 = vcmask 1042432
  %v503 = vsel %vm502, %v496, %v213
  %v504 = vsel %vm502, %v497, %v214
  %v505 = vsel %vm502, %v498, %v205
  %v506 = vsel %vm502, %v499, %v215
  %v507 = vsel %vm502, %v500, %v216
  %v508 = vsel %vm502, %v501, %v211
  %v509 = vsel %vm23, %v503, %v242
  %v510 = vsel %vm23, %v504, %v243
  %v511 = vsel %vm23, %v505, %v234
  %v512 = vsel %vm23, %v506, %v244
  %v513 = vsel %vm23, %v507, %v245
  %v514 = vsel %vm23, %v508, %v240
  %vm515 = vcmask 1044480
  %v516 = vsel %vm515, %v509, %v271
  %v517 = vsel %vm515, %v510, %v272
  %v518 = vsel %vm515, %v511, %v263
  %v519 = vsel %vm515, %v512, %v273
  %v520 = vsel %vm515, %v513, %v274
  %v521 = vsel %vm515, %v514, %v269
  %vm522 = vcmask 1045504
  %v523 = vsel %vm522, %v516, %v300
  %v524 = vsel %vm522, %v517, %v301
  %v525 = vsel %vm522, %v518, %v292
  %v526 = vsel %vm522, %v519, %v302
  %v527 = vsel %vm522, %v520, %v303
  %v528 = vsel %vm522, %v521, %v298
  %vm529 = vcmask 1046528
  %v530 = vsel %vm529, %v523, %v314
  %v531 = vsel %vm529, %v524, %v315
  %v532 = vsel %vm529, %v525, %v316
  %v533 = vsel %vm529, %v526, %v317
  %v534 = vsel %vm529, %v527, %v318
  %v535 = vsel %vm529, %v528, %v319
  %v536 = vsel %vm488, %v338, %v366
  %v537 = vsel %vm488, %v339, %v367
  %v538 = vsel %vm488, %v331, %v359
  %v539 = vsel %vm488, %v340, %v368
  %v540 = vsel %vm488, %v341, %v369
  %v541 = vsel %vm488, %v337, %v365
  %v542 = vsel %vm495, %v536, %v394
  %v543 = vsel %vm495, %v537, %v395
  %v544 = vsel %vm495, %v538, %v387
  %v545 = vsel %vm495, %v539, %v396
  %v546 = vsel %vm495, %v540, %v397
  %v547 = vsel %vm495, %v541, %v393
  %v548 = vsel %vm502, %v542, %v422
  %v549 = vsel %vm502, %v543, %v423
  %v550 = vsel %vm502, %v544, %v415
  %v551 = vsel %vm502, %v545, %v424
  %v552 = vsel %vm502, %v546, %v425
  %v553 = vsel %vm502, %v547, %v421
  %v554 = vsel %vm23, %v548, %v450
  %v555 = vsel %vm23, %v549, %v451
  %v556 = vsel %vm23, %v550, %v443
  %v557 = vsel %vm23, %v551, %v452
  %v558 = vsel %vm23, %v552, %v453
  %v559 = vsel %vm23, %v553, %v449
  %v560 = vsel %vm515, %v554, %v478
  %v561 = vsel %vm515, %v555, %v479
  %v562 = vsel %vm515, %v556, %v471
  %v563 = vsel %vm515, %v557, %v480
  %v564 = vsel %vm515, %v558, %v481
  %v565 = vsel %vm515, %v559, %v477
  %v566 = vld [vmem:[%s0] sm:$0xff]
  %v567 = vld [vmem:[%s0 + $0x8] sm:$0xff]
  %v568 = vlaneseq
  %v569 = vand.u32 %v568, 127
  %v570 = vadd.s32 %v569, 128
  %vm571 = vcmp.lt.s32.totalorder %v569, 0
  %v572 = vsub.s32 0, %v569
  %v573 = vsel %vm571, %v572, %v569
  %v574 = vshrl.u32 %v573, 4
  %v575 = vand.u32 %v573, 15
  %v576 = vsub.s32 0, %v575
  %v577 = vsel %vm571, %v576, %v575
  %vm578 = vcmp.lt.s32.totalorder %v570, 0
  %v579 = vsub.s32 0, %v570
  %v580 = vsel %vm578, %v579, %v570
  %v581 = vshrl.u32 %v580, 4
  %v582 = vand.u32 %v580, 15
  %v583 = vsub.s32 0, %v582
  %v584 = vsel %vm578, %v583, %v582
  %vm585 = vcmp.ne.s32.totalorder %v577, 0
  %vm586 = vcmp.ne.s32.totalorder %v584, 0
  %vm587 = vcmp.lt.s32.totalorder %v577, 0
  %vm588 = vcmp.lt.s32.totalorder %v584, 0
  %vm589 = vmand %vm587, %vm585
  %vm590 = vmand %vm588, %vm586
  %v591 = vadd.s32 %v577, 16
  %v592 = vadd.s32 %v584, 16
  %v593 = vsel %vm589, %v591, %v577
  %v594 = vsel %vm590, %v592, %v584
  %vm595 = vcmp.ge.s32.totalorder %v593, 3
  %vm596 = vcmp.ge.s32.totalorder %v594, 3
  %vm597 = vcmp.lt.s32.totalorder %v593, 19
  %vm598 = vcmp.lt.s32.totalorder %v594, 19
  %vm599 = vmand %vm595, %vm597
  %vm600 = vmand %vm596, %vm598
  %v601 = vsel %vm599, 1.0, 0.0
  %v602 = vsel %vm600, 1.0, 0.0
  %604 = vset.pattern.permute.xlu0 0
  %605 = vperm.xlu0 %604, %v566
  %v606 = vpop.permute.xlu0 %605
  %609 = vset.pattern.permute.xlu0 0
  %610 = vperm.xlu0 %609, %v567
  %v611 = vpop.permute.xlu0 %610
  %v613 = vmul.f32 %v606, %v601
  %v614 = vmul.f32 %v606, %v602
  %v615 = vmul.f32 %v611, %v601
  %v616 = vmul.f32 %v611, %v602
  %v617 = vmul.f32 %v530, %v613
  %v618 = vmul.f32 %v531, %v614
  %v619 = vmul.f32 %v560, %v615
  %v620 = vmul.f32 %v561, %v616
  %v621 = vmul.f32 %v533, %v613
  %v622 = vmul.f32 %v534, %v614
  %v623 = vmul.f32 %v563, %v615
  %v624 = vmul.f32 %v564, %v616
  %v625 = vadd.f32 %v617, 0.0
  %v626 = vadd.f32 %v618, 0.0
  %v627 = vadd.f32 %v619, 0.0
  %v628 = vadd.f32 %v620, 0.0
  %v629 = vadd.f32 %v621, 0.0
  %v630 = vadd.f32 %v622, 0.0
  %v631 = vadd.f32 %v623, 0.0
  %v632 = vadd.f32 %v624, 0.0
  %vm633 = vcmp.ge.s32.totalorder %v593, 2
  %vm634 = vcmp.ge.s32.totalorder %v594, 2
  %vm635 = vcmp.lt.s32.totalorder %v593, 18
  %vm636 = vcmp.lt.s32.totalorder %v594, 18
  %vm637 = vmand %vm633, %vm635
  %vm638 = vmand %vm634, %vm636
  %v639 = vsel %vm637, 1.0, 0.0
  %v640 = vsel %vm638, 1.0, 0.0
  %641 = vset.pattern.permute.xlu0 1
  %642 = vperm.xlu0 %641, %v566
  %v643 = vpop.permute.xlu0 %642
  %645 = vset.pattern.permute.xlu0 1
  %646 = vperm.xlu0 %645, %v567
  %v647 = vpop.permute.xlu0 %646
  %v649 = vmul.f32 %v643, %v639
  %v650 = vmul.f32 %v643, %v640
  %v651 = vmul.f32 %v647, %v639
  %v652 = vmul.f32 %v647, %v640
  %657 = vrot.lane.b32.xlu0 %v649, 1
  %v658 = vpop.permute.xlu0 %657
  %659 = vrot.lane.b32.xlu0 %v650, 1
  %v660 = vpop.permute.xlu0 %659
  %661 = vrot.lane.b32.xlu0 %v651, 1
  %v662 = vpop.permute.xlu0 %661
  %663 = vrot.lane.b32.xlu0 %v652, 1
  %v664 = vpop.permute.xlu0 %663
  %vm665 = vcmask 7168
  %v666 = vsel %vm665, %v658, %v660
  %v667 = vsel %vm665, %v662, %v664
  %v674 = vmul.f32 %v530, %v658
  %v675 = vmul.f32 %v531, %v666
  %v676 = vmul.f32 %v532, %v660
  %v677 = vmul.f32 %v560, %v662
  %v678 = vmul.f32 %v561, %v667
  %v679 = vmul.f32 %v562, %v664
  %v680 = vmul.f32 %v533, %v658
  %v681 = vmul.f32 %v534, %v666
  %v682 = vmul.f32 %v535, %v660
  %v683 = vmul.f32 %v563, %v662
  %v684 = vmul.f32 %v564, %v667
  %v685 = vmul.f32 %v565, %v664
  %698 = vrot.lane.b32.xlu0 %v674, 127
  %v699 = vpop.permute.xlu0 %698
  %700 = vrot.lane.b32.xlu0 %v675, 127
  %v701 = vpop.permute.xlu0 %700
  %702 = vrot.lane.b32.xlu0 %v676, 127
  %v703 = vpop.permute.xlu0 %702
  %704 = vrot.lane.b32.xlu0 %v677, 127
  %v705 = vpop.permute.xlu0 %704
  %706 = vrot.lane.b32.xlu0 %v678, 127
  %v707 = vpop.permute.xlu0 %706
  %708 = vrot.lane.b32.xlu0 %v679, 127
  %v709 = vpop.permute.xlu0 %708
  %710 = vrot.lane.b32.xlu0 %v680, 127
  %v711 = vpop.permute.xlu0 %710
  %712 = vrot.lane.b32.xlu0 %v681, 127
  %v713 = vpop.permute.xlu0 %712
  %714 = vrot.lane.b32.xlu0 %v682, 127
  %v715 = vpop.permute.xlu0 %714
  %716 = vrot.lane.b32.xlu0 %v683, 127
  %v717 = vpop.permute.xlu0 %716
  %718 = vrot.lane.b32.xlu0 %v684, 127
  %v719 = vpop.permute.xlu0 %718
  %720 = vrot.lane.b32.xlu0 %v685, 127
  %v721 = vpop.permute.xlu0 %720
  %vm722 = vcmask 1039360
  %v723 = vsel %vm722, %v699, %v701
  %v724 = vsel %vm722, %v701, %v703
  %v725 = vsel %vm722, %v705, %v707
  %v726 = vsel %vm722, %v707, %v709
  %v727 = vsel %vm722, %v711, %v713
  %v728 = vsel %vm722, %v713, %v715
  %v729 = vsel %vm722, %v717, %v719
  %v730 = vsel %vm722, %v719, %v721
  %v739 = vadd.f32 %v625, %v723
  %v740 = vadd.f32 %v626, %v724
  %v741 = vadd.f32 %v627, %v725
  %v742 = vadd.f32 %v628, %v726
  %v743 = vadd.f32 %v629, %v727
  %v744 = vadd.f32 %v630, %v728
  %v745 = vadd.f32 %v631, %v729
  %v746 = vadd.f32 %v632, %v730
  %vm747 = vcmp.ge.s32.totalorder %v593, 1
  %vm748 = vcmp.ge.s32.totalorder %v594, 1
  %vm749 = vcmp.lt.s32.totalorder %v593, 17
  %vm750 = vcmp.lt.s32.totalorder %v594, 17
  %vm751 = vmand %vm747, %vm749
  %vm752 = vmand %vm748, %vm750
  %v753 = vsel %vm751, 1.0, 0.0
  %v754 = vsel %vm752, 1.0, 0.0
  %755 = vset.pattern.permute.xlu0 2
  %756 = vperm.xlu0 %755, %v566
  %v757 = vpop.permute.xlu0 %756
  %759 = vset.pattern.permute.xlu0 2
  %760 = vperm.xlu0 %759, %v567
  %v761 = vpop.permute.xlu0 %760
  %v763 = vmul.f32 %v757, %v753
  %v764 = vmul.f32 %v757, %v754
  %v765 = vmul.f32 %v761, %v753
  %v766 = vmul.f32 %v761, %v754
  %771 = vrot.lane.b32.xlu0 %v763, 2
  %v772 = vpop.permute.xlu0 %771
  %773 = vrot.lane.b32.xlu0 %v764, 2
  %v774 = vpop.permute.xlu0 %773
  %775 = vrot.lane.b32.xlu0 %v765, 2
  %v776 = vpop.permute.xlu0 %775
  %777 = vrot.lane.b32.xlu0 %v766, 2
  %v778 = vpop.permute.xlu0 %777
  %vm779 = vcmask 15360
  %v780 = vsel %vm779, %v772, %v774
  %v781 = vsel %vm779, %v776, %v778
  %v788 = vmul.f32 %v530, %v772
  %v789 = vmul.f32 %v531, %v780
  %v790 = vmul.f32 %v532, %v774
  %v791 = vmul.f32 %v560, %v776
  %v792 = vmul.f32 %v561, %v781
  %v793 = vmul.f32 %v562, %v778
  %v794 = vmul.f32 %v533, %v772
  %v795 = vmul.f32 %v534, %v780
  %v796 = vmul.f32 %v535, %v774
  %v797 = vmul.f32 %v563, %v776
  %v798 = vmul.f32 %v564, %v781
  %v799 = vmul.f32 %v565, %v778
  %812 = vrot.lane.b32.xlu0 %v788, 126
  %v813 = vpop.permute.xlu0 %812
  %814 = vrot.lane.b32.xlu0 %v789, 126
  %v815 = vpop.permute.xlu0 %814
  %816 = vrot.lane.b32.xlu0 %v790, 126
  %v817 = vpop.permute.xlu0 %816
  %818 = vrot.lane.b32.xlu0 %v791, 126
  %v819 = vpop.permute.xlu0 %818
  %820 = vrot.lane.b32.xlu0 %v792, 126
  %v821 = vpop.permute.xlu0 %820
  %822 = vrot.lane.b32.xlu0 %v793, 126
  %v823 = vpop.permute.xlu0 %822
  %824 = vrot.lane.b32.xlu0 %v794, 126
  %v825 = vpop.permute.xlu0 %824
  %826 = vrot.lane.b32.xlu0 %v795, 126
  %v827 = vpop.permute.xlu0 %826
  %828 = vrot.lane.b32.xlu0 %v796, 126
  %v829 = vpop.permute.xlu0 %828
  %830 = vrot.lane.b32.xlu0 %v797, 126
  %v831 = vpop.permute.xlu0 %830
  %832 = vrot.lane.b32.xlu0 %v798, 126
  %v833 = vpop.permute.xlu0 %832
  %834 = vrot.lane.b32.xlu0 %v799, 126
  %v835 = vpop.permute.xlu0 %834
  %vm836 = vcmask 1031168
  %v837 = vsel %vm836, %v813, %v815
  %v838 = vsel %vm836, %v815, %v817
  %v839 = vsel %vm836, %v819, %v821
  %v840 = vsel %vm836, %v821, %v823
  %v841 = vsel %vm836, %v825, %v827
  %v842 = vsel %vm836, %v827, %v829
  %v843 = vsel %vm836, %v831, %v833
  %v844 = vsel %vm836, %v833, %v835
  %v853 = vadd.f32 %v739, %v837
  %v854 = vadd.f32 %v740, %v838
  %v855 = vadd.f32 %v741, %v839
  %v856 = vadd.f32 %v742, %v840
  %v857 = vadd.f32 %v743, %v841
  %v858 = vadd.f32 %v744, %v842
  %v859 = vadd.f32 %v745, %v843
  %v860 = vadd.f32 %v746, %v844
  %vm861 = vcmp.ge.s32.totalorder %v593, 0
  %vm862 = vcmp.ge.s32.totalorder %v594, 0
  %vm863 = vcmp.lt.s32.totalorder %v593, 16
  %vm864 = vcmp.lt.s32.totalorder %v594, 16
  %vm865 = vmand %vm861, %vm863
  %vm866 = vmand %vm862, %vm864
  %v867 = vsel %vm865, 1.0, 0.0
  %v868 = vsel %vm866, 1.0, 0.0
  %869 = vset.pattern.permute.xlu0 3
  %870 = vperm.xlu0 %869, %v566
  %v871 = vpop.permute.xlu0 %870
  %873 = vset.pattern.permute.xlu0 3
  %874 = vperm.xlu0 %873, %v567
  %v875 = vpop.permute.xlu0 %874
  %v877 = vmul.f32 %v871, %v867
  %v878 = vmul.f32 %v871, %v868
  %v879 = vmul.f32 %v875, %v867
  %v880 = vmul.f32 %v875, %v868
  %885 = vrot.lane.b32.xlu0 %v877, 3
  %v886 = vpop.permute.xlu0 %885
  %887 = vrot.lane.b32.xlu0 %v878, 3
  %v888 = vpop.permute.xlu0 %887
  %889 = vrot.lane.b32.xlu0 %v879, 3
  %v890 = vpop.permute.xlu0 %889
  %891 = vrot.lane.b32.xlu0 %v880, 3
  %v892 = vpop.permute.xlu0 %891
  %vm893 = vcmask 23552
  %v894 = vsel %vm893, %v886, %v888
  %v895 = vsel %vm893, %v890, %v892
  %v902 = vmul.f32 %v530, %v886
  %v903 = vmul.f32 %v531, %v894
  %v904 = vmul.f32 %v532, %v888
  %v905 = vmul.f32 %v560, %v890
  %v906 = vmul.f32 %v561, %v895
  %v907 = vmul.f32 %v562, %v892
  %v908 = vmul.f32 %v533, %v886
  %v909 = vmul.f32 %v534, %v894
  %v910 = vmul.f32 %v535, %v888
  %v911 = vmul.f32 %v563, %v890
  %v912 = vmul.f32 %v564, %v895
  %v913 = vmul.f32 %v565, %v892
  %926 = vrot.lane.b32.xlu0 %v902, 125
  %v927 = vpop.permute.xlu0 %926
  %928 = vrot.lane.b32.xlu0 %v903, 125
  %v929 = vpop.permute.xlu0 %928
  %930 = vrot.lane.b32.xlu0 %v904, 125
  %v931 = vpop.permute.xlu0 %930
  %932 = vrot.lane.b32.xlu0 %v905, 125
  %v933 = vpop.permute.xlu0 %932
  %934 = vrot.lane.b32.xlu0 %v906, 125
  %v935 = vpop.permute.xlu0 %934
  %936 = vrot.lane.b32.xlu0 %v907, 125
  %v937 = vpop.permute.xlu0 %936
  %938 = vrot.lane.b32.xlu0 %v908, 125
  %v939 = vpop.permute.xlu0 %938
  %940 = vrot.lane.b32.xlu0 %v909, 125
  %v941 = vpop.permute.xlu0 %940
  %942 = vrot.lane.b32.xlu0 %v910, 125
  %v943 = vpop.permute.xlu0 %942
  %944 = vrot.lane.b32.xlu0 %v911, 125
  %v945 = vpop.permute.xlu0 %944
  %946 = vrot.lane.b32.xlu0 %v912, 125
  %v947 = vpop.permute.xlu0 %946
  %948 = vrot.lane.b32.xlu0 %v913, 125
  %v949 = vpop.permute.xlu0 %948
  %vm950 = vcmask 1022976
  %v951 = vsel %vm950, %v927, %v929
  %v952 = vsel %vm950, %v929, %v931
  %v953 = vsel %vm950, %v933, %v935
  %v954 = vsel %vm950, %v935, %v937
  %v955 = vsel %vm950, %v939, %v941
  %v956 = vsel %vm950, %v941, %v943
  %v957 = vsel %vm950, %v945, %v947
  %v958 = vsel %vm950, %v947, %v949
  %v967 = vadd.f32 %v853, %v951
  %v968 = vadd.f32 %v854, %v952
  %v969 = vadd.f32 %v855, %v953
  %v970 = vadd.f32 %v856, %v954
  %v971 = vadd.f32 %v857, %v955
  %v972 = vadd.f32 %v858, %v956
  %v973 = vadd.f32 %v859, %v957
  %v974 = vadd.f32 %v860, %v958
  %vm975 = vcmp.ge.s32.totalorder %v593, 4294967295
  %vm976 = vcmp.ge.s32.totalorder %v594, 4294967295
  %vm977 = vcmp.lt.s32.totalorder %v593, 15
  %vm978 = vcmp.lt.s32.totalorder %v594, 15
  %vm979 = vmand %vm975, %vm977
  %vm980 = vmand %vm976, %vm978
  %v981 = vsel %vm979, 1.0, 0.0
  %v982 = vsel %vm980, 1.0, 0.0
  %983 = vset.pattern.permute.xlu0 4
  %984 = vperm.xlu0 %983, %v566
  %v985 = vpop.permute.xlu0 %984
  %987 = vset.pattern.permute.xlu0 4
  %988 = vperm.xlu0 %987, %v567
  %v989 = vpop.permute.xlu0 %988
  %v991 = vmul.f32 %v985, %v981
  %v992 = vmul.f32 %v985, %v982
  %v993 = vmul.f32 %v989, %v981
  %v994 = vmul.f32 %v989, %v982
  %999 = vrot.lane.b32.xlu0 %v991, 4
  %v1000 = vpop.permute.xlu0 %999
  %1001 = vrot.lane.b32.xlu0 %v992, 4
  %v1002 = vpop.permute.xlu0 %1001
  %1003 = vrot.lane.b32.xlu0 %v993, 4
  %v1004 = vpop.permute.xlu0 %1003
  %1005 = vrot.lane.b32.xlu0 %v994, 4
  %v1006 = vpop.permute.xlu0 %1005
  %vm1007 = vcmask 31744
  %v1008 = vsel %vm1007, %v1000, %v1002
  %v1009 = vsel %vm1007, %v1004, %v1006
  %v1016 = vmul.f32 %v530, %v1000
  %v1017 = vmul.f32 %v531, %v1008
  %v1018 = vmul.f32 %v532, %v1002
  %v1019 = vmul.f32 %v560, %v1004
  %v1020 = vmul.f32 %v561, %v1009
  %v1021 = vmul.f32 %v562, %v1006
  %v1022 = vmul.f32 %v533, %v1000
  %v1023 = vmul.f32 %v534, %v1008
  %v1024 = vmul.f32 %v535, %v1002
  %v1025 = vmul.f32 %v563, %v1004
  %v1026 = vmul.f32 %v564, %v1009
  %v1027 = vmul.f32 %v565, %v1006
  %1040 = vrot.lane.b32.xlu0 %v1016, 124
  %v1041 = vpop.permute.xlu0 %1040
  %1042 = vrot.lane.b32.xlu0 %v1017, 124
  %v1043 = vpop.permute.xlu0 %1042
  %1044 = vrot.lane.b32.xlu0 %v1018, 124
  %v1045 = vpop.permute.xlu0 %1044
  %1046 = vrot.lane.b32.xlu0 %v1019, 124
  %v1047 = vpop.permute.xlu0 %1046
  %1048 = vrot.lane.b32.xlu0 %v1020, 124
  %v1049 = vpop.permute.xlu0 %1048
  %1050 = vrot.lane.b32.xlu0 %v1021, 124
  %v1051 = vpop.permute.xlu0 %1050
  %1052 = vrot.lane.b32.xlu0 %v1022, 124
  %v1053 = vpop.permute.xlu0 %1052
  %1054 = vrot.lane.b32.xlu0 %v1023, 124
  %v1055 = vpop.permute.xlu0 %1054
  %1056 = vrot.lane.b32.xlu0 %v1024, 124
  %v1057 = vpop.permute.xlu0 %1056
  %1058 = vrot.lane.b32.xlu0 %v1025, 124
  %v1059 = vpop.permute.xlu0 %1058
  %1060 = vrot.lane.b32.xlu0 %v1026, 124
  %v1061 = vpop.permute.xlu0 %1060
  %1062 = vrot.lane.b32.xlu0 %v1027, 124
  %v1063 = vpop.permute.xlu0 %1062
  %vm1064 = vcmask 1014784
  %v1065 = vsel %vm1064, %v1041, %v1043
  %v1066 = vsel %vm1064, %v1043, %v1045
  %v1067 = vsel %vm1064, %v1047, %v1049
  %v1068 = vsel %vm1064, %v1049, %v1051
  %v1069 = vsel %vm1064, %v1053, %v1055
  %v1070 = vsel %vm1064, %v1055, %v1057
  %v1071 = vsel %vm1064, %v1059, %v1061
  %v1072 = vsel %vm1064, %v1061, %v1063
  %v1081 = vadd.f32 %v967, %v1065
  %v1082 = vadd.f32 %v968, %v1066
  %v1083 = vadd.f32 %v969, %v1067
  %v1084 = vadd.f32 %v970, %v1068
  %v1085 = vadd.f32 %v971, %v1069
  %v1086 = vadd.f32 %v972, %v1070
  %v1087 = vadd.f32 %v973, %v1071
  %v1088 = vadd.f32 %v974, %v1072
  %vm1089 = vcmp.ge.s32.totalorder %v593, 4294967294
  %vm1090 = vcmp.ge.s32.totalorder %v594, 4294967294
  %vm1091 = vcmp.lt.s32.totalorder %v593, 14
  %vm1092 = vcmp.lt.s32.totalorder %v594, 14
  %vm1093 = vmand %vm1089, %vm1091
  %vm1094 = vmand %vm1090, %vm1092
  %v1095 = vsel %vm1093, 1.0, 0.0
  %v1096 = vsel %vm1094, 1.0, 0.0
  %1097 = vset.pattern.permute.xlu0 5
  %1098 = vperm.xlu0 %1097, %v566
  %v1099 = vpop.permute.xlu0 %1098
  %1101 = vset.pattern.permute.xlu0 5
  %1102 = vperm.xlu0 %1101, %v567
  %v1103 = vpop.permute.xlu0 %1102
  %v1105 = vmul.f32 %v1099, %v1095
  %v1106 = vmul.f32 %v1099, %v1096
  %v1107 = vmul.f32 %v1103, %v1095
  %v1108 = vmul.f32 %v1103, %v1096
  %1113 = vrot.lane.b32.xlu0 %v1105, 5
  %v1114 = vpop.permute.xlu0 %1113
  %1115 = vrot.lane.b32.xlu0 %v1106, 5
  %v1116 = vpop.permute.xlu0 %1115
  %1117 = vrot.lane.b32.xlu0 %v1107, 5
  %v1118 = vpop.permute.xlu0 %1117
  %1119 = vrot.lane.b32.xlu0 %v1108, 5
  %v1120 = vpop.permute.xlu0 %1119
  %vm1121 = vcmask 39936
  %v1122 = vsel %vm1121, %v1114, %v1116
  %v1123 = vsel %vm1121, %v1118, %v1120
  %v1130 = vmul.f32 %v530, %v1114
  %v1131 = vmul.f32 %v531, %v1122
  %v1132 = vmul.f32 %v532, %v1116
  %v1133 = vmul.f32 %v560, %v1118
  %v1134 = vmul.f32 %v561, %v1123
  %v1135 = vmul.f32 %v562, %v1120
  %v1136 = vmul.f32 %v533, %v1114
  %v1137 = vmul.f32 %v534, %v1122
  %v1138 = vmul.f32 %v535, %v1116
  %v1139 = vmul.f32 %v563, %v1118
  %v1140 = vmul.f32 %v564, %v1123
  %v1141 = vmul.f32 %v565, %v1120
  %1154 = vrot.lane.b32.xlu0 %v1130, 123
  %v1155 = vpop.permute.xlu0 %1154
  %1156 = vrot.lane.b32.xlu0 %v1131, 123
  %v1157 = vpop.permute.xlu0 %1156
  %1158 = vrot.lane.b32.xlu0 %v1132, 123
  %v1159 = vpop.permute.xlu0 %1158
  %1160 = vrot.lane.b32.xlu0 %v1133, 123
  %v1161 = vpop.permute.xlu0 %1160
  %1162 = vrot.lane.b32.xlu0 %v1134, 123
  %v1163 = vpop.permute.xlu0 %1162
  %1164 = vrot.lane.b32.xlu0 %v1135, 123
  %v1165 = vpop.permute.xlu0 %1164
  %1166 = vrot.lane.b32.xlu0 %v1136, 123
  %v1167 = vpop.permute.xlu0 %1166
  %1168 = vrot.lane.b32.xlu0 %v1137, 123
  %v1169 = vpop.permute.xlu0 %1168
  %1170 = vrot.lane.b32.xlu0 %v1138, 123
  %v1171 = vpop.permute.xlu0 %1170
  %1172 = vrot.lane.b32.xlu0 %v1139, 123
  %v1173 = vpop.permute.xlu0 %1172
  %1174 = vrot.lane.b32.xlu0 %v1140, 123
  %v1175 = vpop.permute.xlu0 %1174
  %1176 = vrot.lane.b32.xlu0 %v1141, 123
  %v1177 = vpop.permute.xlu0 %1176
  %vm1178 = vcmask 1006592
  %v1179 = vsel %vm1178, %v1155, %v1157
  %v1180 = vsel %vm1178, %v1157, %v1159
  %v1181 = vsel %vm1178, %v1161, %v1163
  %v1182 = vsel %vm1178, %v1163, %v1165
  %v1183 = vsel %vm1178, %v1167, %v1169
  %v1184 = vsel %vm1178, %v1169, %v1171
  %v1185 = vsel %vm1178, %v1173, %v1175
  %v1186 = vsel %vm1178, %v1175, %v1177
  %v1195 = vadd.f32 %v1081, %v1179
  %v1196 = vadd.f32 %v1082, %v1180
  %v1197 = vadd.f32 %v1083, %v1181
  %v1198 = vadd.f32 %v1084, %v1182
  %v1199 = vadd.f32 %v1085, %v1183
  %v1200 = vadd.f32 %v1086, %v1184
  %v1201 = vadd.f32 %v1087, %v1185
  %v1202 = vadd.f32 %v1088, %v1186
  %vm1203 = vcmp.ge.s32.totalorder %v593, 4294967293
  %vm1204 = vcmp.ge.s32.totalorder %v594, 4294967293
  %vm1205 = vcmp.lt.s32.totalorder %v593, 13
  %vm1206 = vcmp.lt.s32.totalorder %v594, 13
  %vm1207 = vmand %vm1203, %vm1205
  %vm1208 = vmand %vm1204, %vm1206
  %v1209 = vsel %vm1207, 1.0, 0.0
  %v1210 = vsel %vm1208, 1.0, 0.0
  %1211 = vset.pattern.permute.xlu0 6
  %1212 = vperm.xlu0 %1211, %v566
  %v1213 = vpop.permute.xlu0 %1212
  %1215 = vset.pattern.permute.xlu0 6
  %1216 = vperm.xlu0 %1215, %v567
  %v1217 = vpop.permute.xlu0 %1216
  %v1219 = vmul.f32 %v1213, %v1209
  %v1220 = vmul.f32 %v1213, %v1210
  %v1221 = vmul.f32 %v1217, %v1209
  %v1222 = vmul.f32 %v1217, %v1210
  %1227 = vrot.lane.b32.xlu0 %v1219, 6
  %v1228 = vpop.permute.xlu0 %1227
  %1229 = vrot.lane.b32.xlu0 %v1220, 6
  %v1230 = vpop.permute.xlu0 %1229
  %1231 = vrot.lane.b32.xlu0 %v1221, 6
  %v1232 = vpop.permute.xlu0 %1231
  %1233 = vrot.lane.b32.xlu0 %v1222, 6
  %v1234 = vpop.permute.xlu0 %1233
  %vm1235 = vcmask 48128
  %v1236 = vsel %vm1235, %v1228, %v1230
  %v1237 = vsel %vm1235, %v1232, %v1234
  %v1244 = vmul.f32 %v530, %v1228
  %v1245 = vmul.f32 %v531, %v1236
  %v1246 = vmul.f32 %v532, %v1230
  %v1247 = vmul.f32 %v560, %v1232
  %v1248 = vmul.f32 %v561, %v1237
  %v1249 = vmul.f32 %v562, %v1234
  %v1250 = vmul.f32 %v533, %v1228
  %v1251 = vmul.f32 %v534, %v1236
  %v1252 = vmul.f32 %v535, %v1230
  %v1253 = vmul.f32 %v563, %v1232
  %v1254 = vmul.f32 %v564, %v1237
  %v1255 = vmul.f32 %v565, %v1234
  %1268 = vrot.lane.b32.xlu0 %v1244, 122
  %v1269 = vpop.permute.xlu0 %1268
  %1270 = vrot.lane.b32.xlu0 %v1245, 122
  %v1271 = vpop.permute.xlu0 %1270
  %1272 = vrot.lane.b32.xlu0 %v1246, 122
  %v1273 = vpop.permute.xlu0 %1272
  %1274 = vrot.lane.b32.xlu0 %v1247, 122
  %v1275 = vpop.permute.xlu0 %1274
  %1276 = vrot.lane.b32.xlu0 %v1248, 122
  %v1277 = vpop.permute.xlu0 %1276
  %1278 = vrot.lane.b32.xlu0 %v1249, 122
  %v1279 = vpop.permute.xlu0 %1278
  %1280 = vrot.lane.b32.xlu0 %v1250, 122
  %v1281 = vpop.permute.xlu0 %1280
  %1282 = vrot.lane.b32.xlu0 %v1251, 122
  %v1283 = vpop.permute.xlu0 %1282
  %1284 = vrot.lane.b32.xlu0 %v1252, 122
  %v1285 = vpop.permute.xlu0 %1284
  %1286 = vrot.lane.b32.xlu0 %v1253, 122
  %v1287 = vpop.permute.xlu0 %1286
  %1288 = vrot.lane.b32.xlu0 %v1254, 122
  %v1289 = vpop.permute.xlu0 %1288
  %1290 = vrot.lane.b32.xlu0 %v1255, 122
  %v1291 = vpop.permute.xlu0 %1290
  %vm1292 = vcmask 998400
  %v1293 = vsel %vm1292, %v1269, %v1271
  %v1294 = vsel %vm1292, %v1271, %v1273
  %v1295 = vsel %vm1292, %v1275, %v1277
  %v1296 = vsel %vm1292, %v1277, %v1279
  %v1297 = vsel %vm1292, %v1281, %v1283
  %v1298 = vsel %vm1292, %v1283, %v1285
  %v1299 = vsel %vm1292, %v1287, %v1289
  %v1300 = vsel %vm1292, %v1289, %v1291
  %v1309 = vadd.f32 %v1195, %v1293
  %v1310 = vadd.f32 %v1196, %v1294
  %v1311 = vadd.f32 %v1197, %v1295
  %v1312 = vadd.f32 %v1198, %v1296
  %v1313 = vadd.f32 %v1199, %v1297
  %v1314 = vadd.f32 %v1200, %v1298
  %v1315 = vadd.f32 %v1201, %v1299
  %v1316 = vadd.f32 %v1202, %v1300
  %v1317 = vsel %vm522, %v1311, 0.0
  %v1318 = vadd.f32 %v1309, %v1317
  %v1319 = vrot.slane %v1318, 4
  %v1320 = vadd.f32 %v1318, %v1319
  %v1321 = vrot.slane %v1320, 2
  %v1322 = vadd.f32 %v1320, %v1321
  %v1323 = vrot.slane %v1322, 1
  %v1324 = vadd.f32 %v1322, %v1323
  %v1325 = vsel %vm522, %v1312, 0.0
  %v1326 = vadd.f32 %v1310, %v1325
  %v1327 = vrot.slane %v1326, 4
  %v1328 = vadd.f32 %v1326, %v1327
  %v1329 = vrot.slane %v1328, 2
  %v1330 = vadd.f32 %v1328, %v1329
  %v1331 = vrot.slane %v1330, 1
  %v1332 = vadd.f32 %v1330, %v1331
  %v1333 = vsel %vm522, %v1315, 0.0
  %v1334 = vadd.f32 %v1313, %v1333
  %v1335 = vrot.slane %v1334, 4
  %v1336 = vadd.f32 %v1334, %v1335
  %v1337 = vrot.slane %v1336, 2
  %v1338 = vadd.f32 %v1336, %v1337
  %v1339 = vrot.slane %v1338, 1
  %v1340 = vadd.f32 %v1338, %v1339
  %v1341 = vsel %vm522, %v1316, 0.0
  %v1342 = vadd.f32 %v1314, %v1341
  %v1343 = vrot.slane %v1342, 4
  %v1344 = vadd.f32 %v1342, %v1343
  %v1345 = vrot.slane %v1344, 2
  %v1346 = vadd.f32 %v1344, %v1345
  %v1347 = vrot.slane %v1346, 1
  %v1348 = vadd.f32 %v1346, %v1347
  %s1349 = sld [smem:[#allocation2]]
  %v1350 = vstv %s1349
  %v1351 = vadd.f32 %v1324, %v1350
  %v1352 = vadd.f32 %v1332, %v1350
  %v1353 = vadd.f32 %v1340, %v1350
  %v1354 = vadd.f32 %v1348, %v1350
  %v1355 = vmax.f32 %v1351, -30.0
  %v1356 = vmax.f32 %v1352, -30.0
  %v1357 = vmax.f32 %v1353, -30.0
  %v1358 = vmax.f32 %v1354, -30.0
  %v1359 = vmin.f32 %v1355, 30.0
  %v1360 = vmin.f32 %v1356, 30.0
  %v1361 = vmin.f32 %v1357, 30.0
  %v1362 = vmin.f32 %v1358, 30.0
  %v1363 = vsub.f32 0.0, %v1359
  %v1364 = vsub.f32 0.0, %v1360
  %v1365 = vsub.f32 0.0, %v1361
  %v1366 = vsub.f32 0.0, %v1362
  %v1367 = vmul.f32 %v1363, 1.442695
  %v1368 = vpow.pop %v1367
  %v1369 = vmul.f32 %v1364, 1.442695
  %v1370 = vpow.pop %v1369
  %v1371 = vmul.f32 %v1365, 1.442695
  %v1372 = vpow.pop %v1371
  %v1373 = vmul.f32 %v1366, 1.442695
  %v1374 = vpow.pop %v1373
  %v1375 = vadd.f32 %v1368, 1.0
  %v1376 = vadd.f32 %v1370, 1.0
  %v1377 = vadd.f32 %v1372, 1.0
  %v1378 = vadd.f32 %v1374, 1.0
  %v1379 = vrcp.pop %v1375
  %v1380 = vrcp.pop %v1376
  %v1381 = vrcp.pop %v1377
  %v1382 = vrcp.pop %v1378
  %v1383 = vmul.f32 %v1375, %v1379
  %v1384 = vmul.f32 %v1376, %v1380
  %v1385 = vmul.f32 %v1377, %v1381
  %v1386 = vmul.f32 %v1378, %v1382
  %v1387 = vsub.f32 2.0, %v1383
  %v1388 = vsub.f32 2.0, %v1384
  %v1389 = vsub.f32 2.0, %v1385
  %v1390 = vsub.f32 2.0, %v1386
  %v1391 = vmul.f32 %v1379, %v1387
  %v1392 = vmul.f32 %v1380, %v1388
  %v1393 = vmul.f32 %v1381, %v1389
  %v1394 = vmul.f32 %v1382, %v1390
  %v1399 = vcombine.low %v1391, %v1392
  %v1400 = vcombine.low %v1393, %v1394
  %v1403 = vmul.f32 %v15, %v1399
  %v1404 = vmul.f32 %v16, %v1400
  %1405 = vst [vmem:[%s3] sm:$0xff] %v1403
  %1406 = vst [vmem:[%s3 + $0x8] sm:$0xff] %v1404
  // Predicated region
  $region14: #{spatial_gate_pallas.1} parent=0 // pred_check
    _
  $region15: #{spatial_gate_pallas.1} parent=0 // pred_check_branch
    %1408 = sbr.rel (0) target = $region17
  $region16: #{spatial_gate_pallas.1} parent=0 // pred_region
    _
  $region17: #{spatial_gate_pallas.1} parent=0 // pred_fallthru
    _
  // Predicated region
  $region18: #{spatial_gate_pallas.1} parent=0 // pred_check
    _
  $region19: #{spatial_gate_pallas.1} parent=0 // pred_check_branch
    %1410 = sbr.rel (0) target = $region21
  $region20: #{spatial_gate_pallas.1} parent=0 // pred_region
    _
  $region21: #{spatial_gate_pallas.1} parent=0 // pred_fallthru
    _

</llo_original>
